<compile_context>
chip_gen: v6e
topology: v6e:2x2x1
jax: 0.10.0
libtpu: 0.0.40
codegen_flags: <defaults>
</compile_context>

<pallas_src>
import functools
import math

import jax
import jax.numpy as jnp
from jax.experimental import pallas as pl
from jax.experimental.pallas import tpu as pltpu

_TARGET_BLOCK_BYTES = 4 * 1024 * 1024   # ~4 MiB input block: good on v5e/v6e/v7x
_SINGLE_BLOCK_BYTES = 512 * 1024        # below this, grid-step overhead dominates


def _sublane_multiple(dtype) -> int:
    # f32 -> 8, bf16/f16 -> 16, int8/fp8 -> 32 sublane packing.
    return max(8, 32 // jnp.dtype(dtype).itemsize)


def _fill_value(dtype):
    # Identity element for `min` (used to mask padded reduction elements).
    if jnp.issubdtype(dtype, jnp.floating):
        return jnp.array(jnp.inf, dtype=dtype)
    if jnp.issubdtype(dtype, jnp.integer):
        return jnp.array(jnp.iinfo(dtype).max, dtype=dtype)
    return jnp.array(True, dtype=dtype)


def _amin3d_kernel(x_ref, o_ref, *, tile_r, r_total, needs_mask):
    # Block: (tile_a, tile_r, B); reduce over axis 1 (the reduced dim).
    k = pl.program_id(1)
    x = x_ref[...]
    if needs_mask:
        r_idx = jax.lax.broadcasted_iota(jnp.int32, x.shape, 1) + k * tile_r
        x = jnp.where(r_idx < r_total, x, _fill_value(x.dtype))
    partial = jnp.min(x, axis=1)

    @pl.when(k == 0)
    def _():
        o_ref[...] = partial

    @pl.when(k > 0)
    def _():
        o_ref[...] = jnp.minimum(o_ref[...], partial)


def _amin2d_kernel(x_ref, o_ref, *, tile_r, r_total, needs_mask):
    # Block: (tile_m, tile_r); lane-dense reduction over the last (lane) axis.
    k = pl.program_id(1)
    x = x_ref[...]
    if needs_mask:
        r_idx = jax.lax.broadcasted_iota(jnp.int32, x.shape, 1) + k * tile_r
        x = jnp.where(r_idx < r_total, x, _fill_value(x.dtype))
    partial = jnp.min(x, axis=1, keepdims=True)   # (tile_m, 1)

    @pl.when(k == 0)
    def _():
        o_ref[...] = partial

    @pl.when(k > 0)
    def _():
        o_ref[...] = jnp.minimum(o_ref[...], partial)


def _round_tile(v: int, mult: int, full: int) -> int:
    """Round v down to a multiple of `mult`, clipped to [mult, full]."""
    if v >= full:
        return full
    return min(full, max(mult, (v // mult) * mult))


def _choose_tiles(kept: int, r: int, inner_bytes: int, bytes_per_r: int,
                  kept_mult: int, r_mult: int):
    """Pick (tile_kept, tile_r) under a ~4 MiB per-block VMEM budget."""
    total = kept * inner_bytes
    if total <= _SINGLE_BLOCK_BYTES:
        return kept, r

    tile_kept_raw = _TARGET_BLOCK_BYTES // max(inner_bytes, 1)
    if tile_kept_raw >= kept_mult:
        tile_kept = _round_tile(tile_kept_raw, kept_mult, kept)
        # Guarantee >= 2 grid steps when possible so both v7x TensorCores get
        # work (kept-axis grid dim is marked "parallel").
        if tile_kept >= kept and kept >= 2 * kept_mult:
            tile_kept = _round_tile(pl.cdiv(kept, 2), kept_mult, kept)
        return tile_kept, r

    # Fat rows: even the minimal row-group exceeds the budget -> also tile the
    # reduction extent and accumulate a running minimum across the last
    # ("arbitrary") grid axis.
    tile_kept = min(kept, kept_mult)
    tile_r_raw = _TARGET_BLOCK_BYTES // max(tile_kept * bytes_per_r, 1)
    tile_r = _round_tile(tile_r_raw, r_mult, r)
    # TODO(synk): if even a (kept_mult, r_mult, B) block exceeds VMEM, the kept
    # trailing extent B would also need tiling; not expected for these shapes.
    return tile_kept, tile_r


def amin_pallas(x: jax.Array, dim: int) -> jax.Array:
    """Computes jnp.min(x, axis=dim) with a Pallas TPU kernel."""
    ndim = x.ndim
    dim = dim % ndim
    dtype = x.dtype
    itemsize = jnp.dtype(dtype).itemsize
    sub = _sublane_multiple(dtype)

    lead_shape = x.shape[:dim]
    tail_shape = x.shape[dim + 1:]
    out_final_shape = lead_shape + tail_shape
    A = math.prod(lead_shape) if lead_shape else 1
    R = x.shape[dim]
    B = math.prod(tail_shape) if tail_shape else 1

    if R == 1:
        # Degenerate reduction: amin over a size-1 dim is a squeeze.
        return x.reshape(out_final_shape)

    # Layout choice: keep whichever of B / R is larger (preferably >=128) on
    # the 128-lane axis of the blocks.
    use_3d = (B >= 128) or (B > R)

    if use_3d:
        # Pure metadata reshape for a contiguous array — no extra HBM passes.
        x_in = x.reshape(A, R, B)
        tile_a, tile_r = _choose_tiles(A, R, R * B * itemsize, B * itemsize,
                                       kept_mult=sub, r_mult=sub)
        grid = (pl.cdiv(A, tile_a), pl.cdiv(R, tile_r))
        needs_mask = (R % tile_r) != 0
        kernel = functools.partial(_amin3d_kernel, tile_r=tile_r, r_total=R,
                                   needs_mask=needs_mask)
        in_spec = pl.BlockSpec((tile_a, tile_r, B), lambda i, k: (i, k, 0))
        out_spec = pl.BlockSpec((tile_a, B), lambda i, k: (i, 0))
        out_struct = jax.ShapeDtypeStruct((A, B), dtype)
        in_block_bytes = tile_a * tile_r * B * itemsize
        out_block_bytes = tile_a * B * itemsize
    else:
        # Narrow (or absent) kept trailing extent: move the reduced dim last
        # (a no-op when dim == ndim-1) and reduce over the lane axis at full
        # 8x128 vreg occupancy.
        xt = jnp.moveaxis(x, dim, -1)
        M = A * B
        x_in = xt.reshape(M, R)
        tile_m, tile_r = _choose_tiles(M, R, R * itemsize, itemsize,
                                       kept_mult=sub, r_mult=128)
        grid = (pl.cdiv(M, tile_m), pl.cdiv(R, tile_r))
        needs_mask = (R % tile_r) != 0
        kernel = functools.partial(_amin2d_kernel, tile_r=tile_r, r_total=R,
                                   needs_mask=needs_mask)
        in_spec = pl.BlockSpec((tile_m, tile_r), lambda i, k: (i, k))
        out_spec = pl.BlockSpec((tile_m, 1), lambda i, k: (i, 0))
        out_struct = jax.ShapeDtypeStruct((M, 1), dtype)
        in_block_bytes = tile_m * tile_r * itemsize
        out_block_bytes = tile_m * itemsize

    # Explicit VMEM budget: double-buffered in + out blocks plus headroom.
    vmem_limit = int(2 * (in_block_bytes + out_block_bytes)) + (4 << 20)
    vmem_limit = max(vmem_limit, 16 << 20)

    cost = pl.CostEstimate(
        flops=A * R * B,                       # one min-compare per element
        transcendentals=0,
        bytes_accessed=(A * R * B + A * B) * itemsize,
    )

    out = pl.pallas_call(
        kernel,
        out_shape=out_struct,
        grid=grid,
        in_specs=[in_spec],
        out_specs=out_spec,
        compiler_params=pltpu.CompilerParams(
            dimension_semantics=("parallel", "arbitrary"),
            vmem_limit_bytes=vmem_limit,
        ),
        cost_estimate=cost,
    )(x_in)

    return out.reshape(out_final_shape)


def amin_module_forward(x: jax.Array, dim: int):
    """Mirrors the PyTorch module: runs the profiled amin op and returns the
    inputs unchanged (plus the amin result for validation)."""
    mins = amin_pallas(x, dim)
    return x, mins


if __name__ == "__main__":
    key = jax.random.PRNGKey(0)

    # Main case: reduce over the channel dim of a small NCHW tensor
    # -> lane-dense 3-D path (kept trailing extent = 16*16 = 256 lanes).
    x = jax.random.normal(key, (2, 4, 16, 16), dtype=jnp.float32) * 3.0
    dim = 1
    out, mins = amin_module_forward(x, dim)
    jax.block_until_ready(out)
    jax.block_until_ready(mins)

    ref = jnp.min(x, axis=dim)
    assert mins.shape == ref.shape and mins.dtype == x.dtype
    assert bool(jnp.array_equal(mins, ref))
    assert out.shape == x.shape and bool(jnp.array_equal(out, x))

    # Also exercise the lane-dense 2-D path (reduction over the innermost dim).
    y = jax.random.normal(jax.random.PRNGKey(0), (4, 8, 32), dtype=jnp.float32)
    out_y, mins_y = amin_module_forward(y, -1)
    jax.block_until_ready(mins_y)
    assert bool(jnp.array_equal(mins_y, jnp.min(y, axis=-1)))
    assert bool(jnp.array_equal(out_y, y))

    print("KERNEL_OK")
</pallas_src>

<mosaic_0001>
module attributes {stable_mosaic.version = 11 : i64} {
  func.func @_amin3d_kernel(%arg0: i32, %arg1: i32, %arg2: memref<2x4x256xf32, #tpu.memory_space<vmem>>, %arg3: memref<2x256xf32, #tpu.memory_space<vmem>>) attributes {dimension_semantics = [#tpu.dimension_semantics<parallel>, #tpu.dimension_semantics<arbitrary>], iteration_bounds = array<i64: 1, 1>, scalar_prefetch = 0 : i64, scratch_operands = 0 : i64, tpu.core_type = #tpu.core_type<tc>, window_params = [{transform_indices = @transform_0, window_bounds = array<i64: 2, 4, 256>}, {transform_indices = @transform_1, window_bounds = array<i64: 2, 256>}]} {
    %c0 = arith.constant 0 : index
    %c0_0 = arith.constant 0 : index
    %c0_1 = arith.constant 0 : index
    %0 = vector.load %arg2[%c0, %c0_0, %c0_1] : memref<2x4x256xf32, #tpu.memory_space<vmem>>, vector<2x4x256xf32>
    %cst = arith.constant dense<0x7F800000> : vector<2x256xf32>
    %1 = vector.multi_reduction <minimumf>, %0, %cst [1] : vector<2x4x256xf32> to vector<2x256xf32>
    %c0_i32 = arith.constant 0 : i32
    %2 = arith.cmpi eq, %arg1, %c0_i32 : i32
    %3 = arith.extui %2 : i1 to i32
    %c0_i32_2 = arith.constant 0 : i32
    %4 = arith.cmpi ne, %3, %c0_i32_2 : i32
    scf.if %4 {
      %c0_5 = arith.constant 0 : index
      %c0_6 = arith.constant 0 : index
      %8 = vector.load %arg3[%c0_5, %c0_6] : memref<2x256xf32, #tpu.memory_space<vmem>>, vector<2x256xf32>
      tpu.vector_store %arg3[%c0_5, %c0_6], %1 {strides = array<i32>} : memref<2x256xf32, #tpu.memory_space<vmem>>, vector<2x256xf32>,
    } else {
    }
    %c0_i32_3 = arith.constant 0 : i32
    %5 = arith.cmpi sgt, %arg1, %c0_i32_3 : i32
    %6 = arith.extui %5 : i1 to i32
    %c0_i32_4 = arith.constant 0 : i32
    %7 = arith.cmpi ne, %6, %c0_i32_4 : i32
    scf.if %7 {
      %c0_5 = arith.constant 0 : index
      %c0_6 = arith.constant 0 : index
      %8 = vector.load %arg3[%c0_5, %c0_6] : memref<2x256xf32, #tpu.memory_space<vmem>>, vector<2x256xf32>
      %9 = arith.minimumf %8, %1 : vector<2x256xf32>
      %c0_7 = arith.constant 0 : index
      %c0_8 = arith.constant 0 : index
      %10 = vector.load %arg3[%c0_7, %c0_8] : memref<2x256xf32, #tpu.memory_space<vmem>>, vector<2x256xf32>
      tpu.vector_store %arg3[%c0_7, %c0_8], %9 {strides = array<i32>} : memref<2x256xf32, #tpu.memory_space<vmem>>, vector<2x256xf32>,
    } else {
    }
    return
  }
  func.func @transform_0(%arg0: i32, %arg1: i32) -> (i32, i32, i32) {
    %c0_i32 = arith.constant 0 : i32
    %c0_i32_0 = arith.constant 0 : i32
    return %arg0, %arg1, %c0_i32 : i32, i32, i32
  }
  func.func @transform_1(%arg0: i32, %arg1: i32) -> (i32, i32) {
    %c0_i32 = arith.constant 0 : i32
    %c0_i32_0 = arith.constant 0 : i32
    return %arg0, %c0_i32 : i32, i32
  }
}

</mosaic_0001>

<llo_original>
// kernel: tpu_custom_call.1
$region0: #{tpu_custom_call.1}
  #allocation0 [shape = 'u32[]', space=smem, size = 0x4, offset = 0x4, fixed_abs, tag = 'smem constant byte address 0x4 - core index']
  #allocation1 [shape = 'u32[144,128]{1,0:T(1,128)}', space=vmem, size = 0x12000, scoped, tag = 'internal scratch']
  %s0 = inlined_call_operand.hbm [shape: f32[2,4,256], index: 0, kind: input, shape index: {}]
  %s1 = inlined_call_operand.hbm [shape: f32[2,256], index: 1, kind: output, shape index: {}]
  %s2 = sld [smem:[#allocation0]]
  $region26: #{tpu_custom_call.1} parent=0
    _
  %s4 = ssub.s32 1, %s2
  %s5 = scalar_select 0, %s4, %s2
  $region1: #{tpu_custom_call.1} parent=0
    #allocation2 [shape = 'u8[8192]{0}', space=vmem, size = 0x2000, scoped, tag = 'input window, operand 0, single buffered']
    #allocation3 [shape = 's32[1]{0}', space=sflag, size = 0x4, scoped, tag = 'scoped memory for tpu_custom_call.1']
    #allocation4 [shape = 's32[1]{0}', space=sflag, size = 0x4, scoped, tag = 'scoped memory for tpu_custom_call.1']
    #allocation5 [shape = 'u8[2048]{0}', space=vmem, size = 0x800, scoped, tag = 'output window, operand 0, single buffered']
    %6 = vsyncpa [#allocation3], 0
    %7 = vsyncpa [#allocation4], 0
    // Predicated region
    $region2: #{tpu_custom_call.1} parent=1 // pred_check
      _
    $region3: #{tpu_custom_call.1} parent=1 // pred_check_branch
      %9 = sbr.rel (0) target = $region5
    $region4: #{tpu_custom_call.1} parent=1 // pred_region
      %s11 = ssub.s32 256, 256
      %12 = vsyncadd [#allocation3], %s11
      %s13 = sshll.u32 [#allocation2], 4
      %s14 = int_to_ptr.vmem [resolvable:$true] %s13
      %19 = dma.hbm_to_vmem [thread:$0]  %s0, 256, %s14, [#allocation3], 128, 128, 8
    $region5: #{tpu_custom_call.1} parent=1 // pred_fallthru
      _
    // Predicated region
    $region6: #{tpu_custom_call.1} parent=1 // pred_check
      _
    $region7: #{tpu_custom_call.1} parent=1 // pred_check_branch
      %21 = sbr.rel (0) target = $region9
    $region8: #{tpu_custom_call.1} parent=1 // pred_region
      %22 = dma.done [#allocation3], 256
    $region9: #{tpu_custom_call.1} parent=1 // pred_fallthru
      _
    %v23 = vld [vmem:[#allocation2] sm:$0xff]
    %v24 = vld [vmem:[#allocation2 + $0x8] sm:$0xff]
    %v27 = vcombine.high %v23, %v23
    %v28 = vcombine.high %v24, %v24
    %vm31 = vcmask 1043456
    %v32 = vsel %vm31, %v23, inf
    %v33 = vrot.slane %v32, 4
    %v34 = vmin.f32 %v32, %v33
    %v35 = vrot.slane %v34, 2
    %v36 = vmin.f32 %v34, %v35
    %v37 = vrot.slane %v36, 1
    %v38 = vmin.f32 %v36, %v37
    %v39 = vsel %vm31, %v27, inf
    %v40 = vrot.slane %v39, 4
    %v41 = vmin.f32 %v39, %v40
    %v42 = vrot.slane %v41, 2
    %v43 = vmin.f32 %v41, %v42
    %v44 = vrot.slane %v43, 1
    %v45 = vmin.f32 %v43, %v44
    %v46 = vsel %vm31, %v24, inf
    %v47 = vrot.slane %v46, 4
    %v48 = vmin.f32 %v46, %v47
    %v49 = vrot.slane %v48, 2
    %v50 = vmin.f32 %v48, %v49
    %v51 = vrot.slane %v50, 1
    %v52 = vmin.f32 %v50, %v51
    %v53 = vsel %vm31, %v28, inf
    %v54 = vrot.slane %v53, 4
    %v55 = vmin.f32 %v53, %v54
    %v56 = vrot.slane %v55, 2
    %v57 = vmin.f32 %v55, %v56
    %v58 = vrot.slane %v57, 1
    %v59 = vmin.f32 %v57, %v58
    %p60 = scmp.eq.s32.totalorder 0, 0
    // Predicated region
    $region10: #{tpu_custom_call.1} parent=1 // pred_check
      %p61 = pneg %p60
    $region11: #{tpu_custom_call.1} parent=1 // pred_check_branch
      %63 = sbr.rel (%p61) target = $region13
    $region12: #{tpu_custom_call.1} parent=1 // pred_region
      %v68 = vcombine.low %v38, %v45
      %v70 = vunpack.c.l.s4 1983009808
      %v71 = vunpack.c.0.s8 %v70
      %v72 = vlaneseq
      %v73 = vshrl.u32 %v72, 7
      %v74 = vsub.s32 %v71, %v73
      %v75 = vrot.slane %v68, %v74
      %v76 = vcombine.low %v52, %v59
      %v78 = vunpack.c.l.s4 1983009808
      %v79 = vunpack.c.0.s8 %v78
      %v80 = vlaneseq
      %v81 = vshrl.u32 %v80, 7
      %v82 = vsub.s32 %v79, %v81
      %v83 = vrot.slane %v76, %v82
      %vm84 = vcmask 1044484
      %v85 = vsel %vm84, %v75, %v75
      %vm86 = vcmask 1046534
      %v87 = vsel %vm86, %v75, %v85
      %v88 = vrot.slane %v83, 7
      %vm89 = vcmask 1041409
      %v90 = vsel %vm89, %v88, %v87
      %vm91 = vcmask 1043459
      %v92 = vsel %vm91, %v88, %v90
      %vm93 = vcmask 1045509
      %v94 = vsel %vm93, %v88, %v92
      %vm95 = vcmask 1047559
      %v96 = vsel %vm95, %v88, %v94
      %98 = vst [vmem:[#allocation5] sm:$0xf] %v96
    $region13: #{tpu_custom_call.1} parent=1 // pred_fallthru
      _
    %p99 = scmp.gt.s32.totalorder 0, 0
    // Predicated region
    $region14: #{tpu_custom_call.1} parent=1 // pred_check
      %p100 = pneg %p99
    $region15: #{tpu_custom_call.1} parent=1 // pred_check_branch
      %102 = sbr.rel (%p100) target = $region17
    $region16: #{tpu_custom_call.1} parent=1 // pred_region
      %v103 = vld [vmem:[#allocation5] sm:$0xf]
      %v108 = vcombine.low %v38, %v45
      %v110 = vunpack.c.l.s4 1983009808
      %v111 = vunpack.c.0.s8 %v110
      %v112 = vlaneseq
      %v113 = vshrl.u32 %v112, 7
      %v114 = vsub.s32 %v111, %v113
      %v115 = vrot.slane %v108, %v114
      %v116 = vcombine.low %v52, %v59
      %v118 = vunpack.c.l.s4 1983009808
      %v119 = vunpack.c.0.s8 %v118
      %v120 = vlaneseq
      %v121 = vshrl.u32 %v120, 7
      %v122 = vsub.s32 %v119, %v121
      %v123 = vrot.slane %v116, %v122
      %vm124 = vcmask 1044484
      %v125 = vsel %vm124, %v115, %v115
      %vm126 = vcmask 1046534
      %v127 = vsel %vm126, %v115, %v125
      %v128 = vrot.slane %v123, 7
      %vm129 = vcmask 1041409
      %v130 = vsel %vm129, %v128, %v127
      %vm131 = vcmask 1043459
      %v132 = vsel %vm131, %v128, %v130
      %vm133 = vcmask 1045509
      %v134 = vsel %vm133, %v128, %v132
      %vm135 = vcmask 1047559
      %v136 = vsel %vm135, %v128, %v134
      %v138 = vmin.f32 %v103, %v136
      %139 = vst [vmem:[#allocation5] sm:$0xf] %v138
    $region17: #{tpu_custom_call.1} parent=1 // pred_fallthru
      _
    // Predicated region
    $region18: #{tpu_custom_call.1} parent=1 // pred_check
      _
    $region19: #{tpu_custom_call.1} parent=1 // pred_check_branch
      %141 = sbr.rel (0) target = $region21
    $region20: #{tpu_custom_call.1} parent=1 // pred_region
      %s143 = ssub.s32 64, 64
      %144 = vsyncadd [#allocation4], %s143
      %s146 = sshll.u32 [#allocation5], 4
      %s147 = int_to_ptr.vmem [resolvable:$true] %s146
      %149 = dma.vmem_to_hbm [thread:$0]  %s147, 64, %s1, [#allocation4]
    $region21: #{tpu_custom_call.1} parent=1 // pred_fallthru
      _
    // Predicated region
    $region22: #{tpu_custom_call.1} parent=1 // pred_check
      _
    $region23: #{tpu_custom_call.1} parent=1 // pred_check_branch
      %151 = sbr.rel (0) target = $region25
    $region24: #{tpu_custom_call.1} parent=1 // pred_region
      %152 = dma.done [#allocation4], 64
    $region25: #{tpu_custom_call.1} parent=1 // pred_fallthru
      _
    %153 = vsyncpa [#allocation3], 1
    %154 = vsyncpa [#allocation4], 1

</llo_original>
